<compile_context>
chip_gen: v6e
topology: v6e:2x2x1
jax: 0.10.0
libtpu: 0.0.40
codegen_flags: <defaults>
</compile_context>

<pallas_src>
import jax
import jax.numpy as jnp
from jax.experimental import pallas as pl
from jax.experimental.pallas import tpu as pltpu

_MAX_BLOCK_B = 2048  # max batch rows per grid step (weights are VMEM-resident anyway)


def _round_up(x, m):
    return (x + m - 1) // m * m


def _is_v5e():
    try:
        kind = jax.devices()[0].device_kind.lower()
    except Exception:
        return False
    return ("v5 lite" in kind) or ("v5e" in kind) or ("v5litepod" in kind)


def _critic_kernel(state_ref, action_ref,
                   w1s_ref, w1a_ref, b1_ref,
                   w2_ref, b2_ref, w3_ref, b3_ref,
                   q1_ref, q2_ref):
    # w2_ref: (1, W, W) fused block-diagonal layer 2, or (2, Hp, Hp) per-head split (v5e).
    n_blk, Hb, _ = w2_ref.shape

    s_bf = state_ref[...].astype(jnp.bfloat16)
    a_bf = action_ref[...].astype(jnp.bfloat16)

    # Layer 1: both heads fused along the output axis; no concat of the inputs.
    h1 = (jnp.dot(s_bf, w1s_ref[...], preferred_element_type=jnp.float32)
          + jnp.dot(a_bf, w1a_ref[...], preferred_element_type=jnp.float32)
          + b1_ref[...])
    h1 = jnp.maximum(h1, 0.0).astype(jnp.bfloat16)

    if n_blk == 1:
        # Layer 2: single block-diagonal matmul covering both heads.
        h2 = jnp.dot(h1, w2_ref[0], preferred_element_type=jnp.float32) + b2_ref[...]
        h2 = jnp.maximum(h2, 0.0)
        # Layer 3 (H -> 1): VPU multiply + lane reduction (no N=1 MXU pass). w3 rows are
        # already masked to their head's column block, so one fused h2 works for both.
        q1 = jnp.sum(h2 * w3_ref[0:1, :], axis=-1) + b3_ref[0]
        q2 = jnp.sum(h2 * w3_ref[1:2, :], axis=-1) + b3_ref[1]
    else:
        # v5e fallback when 2*H > 128: two per-head (Hp,Hp) matmuls (MXU is 128x128 there).
        h2a = jnp.dot(h1[:, :Hb], w2_ref[0],
                      preferred_element_type=jnp.float32) + b2_ref[:, :Hb]
        h2b = jnp.dot(h1[:, Hb:], w2_ref[1],
                      preferred_element_type=jnp.float32) + b2_ref[:, Hb:]
        h2a = jnp.maximum(h2a, 0.0)
        h2b = jnp.maximum(h2b, 0.0)
        q1 = jnp.sum(h2a * w3_ref[0:1, :], axis=-1) + b3_ref[0]
        q2 = jnp.sum(h2b * w3_ref[1:2, :], axis=-1) + b3_ref[1]

    # Lane-dense stores: each head is one (1, TB) row -> unmasked full-lane vst.
    q1_ref[...] = q1[None, :]
    q2_ref[...] = q2[None, :]


def init_critic_params(key, state_dim, action_dim, hidden_dim=128, dtype=jnp.float32):
    """Raw params matching the PyTorch module (weights stored as [in, out])."""
    in_dim = state_dim + action_dim
    shapes = [
        (in_dim, hidden_dim), (1, hidden_dim),
        (hidden_dim, hidden_dim), (1, hidden_dim),
        (hidden_dim, 1), (1, 1),
    ]
    params = {}
    keys = jax.random.split(key, 2 * len(shapes))
    k = 0
    for head in ("q1", "q2"):
        vals = []
        for shp in shapes:
            vals.append((0.1 * jax.random.normal(keys[k], shp)).astype(dtype))
            k += 1
        params[head] = tuple(vals)
    return params


def pack_critic_params(params, state_dim, split_layer2=None):
    """One-time packing into the kernel layout.

    Fused mode (default): layer-1 width W = round_up(2*H, 128); layer 2 is ONE
    block-diagonal (W,W) matrix [[w2_q1, 0], [0, w2_q2]].
    Split mode (auto on v5e when 2*H > 128): per-head Hp = round_up(H,128), layer-1
    width 2*Hp, layer 2 stacked as (2, Hp, Hp).
    Zero padding is exact: padded b1/b2/w3 entries are zero and ReLU(0)=0.
    """
    q1w1, q1b1, q1w2, q1b2, q1w3, q1b3 = params["q1"]
    q2w1, q2b1, q2w2, q2b2, q2w3, q2b3 = params["q2"]
    _, H = q1w1.shape

    if split_layer2 is None:
        split_layer2 = (2 * H > 128) and _is_v5e()

    if split_layer2:
        Hp = _round_up(H, 128)
        W = 2 * Hp
        off = Hp          # column offset of head 2 in the fused layer-1 output
    else:
        W = _round_up(2 * H, 128)
        off = H

    def two_head_cols(a, b):
        z = jnp.zeros((a.shape[0], W), jnp.float32)
        z = z.at[:, :H].set(a.astype(jnp.float32))
        z = z.at[:, off:off + H].set(b.astype(jnp.float32))
        return z

    w1s = two_head_cols(q1w1[:state_dim], q2w1[:state_dim])   # (S, W)
    w1a = two_head_cols(q1w1[state_dim:], q2w1[state_dim:])   # (A, W)
    b1 = two_head_cols(q1b1, q2b1)                            # (1, W)
    b2 = two_head_cols(q1b2, q2b2)                            # (1, W)

    if split_layer2:
        def pad_sq(w):
            return jnp.pad(w.astype(jnp.float32), ((0, Hp - H), (0, Hp - H)))
        w2 = jnp.stack([pad_sq(q1w2), pad_sq(q2w2)])          # (2, Hp, Hp)
        w3 = jnp.zeros((2, Hp), jnp.float32)
        w3 = w3.at[0, :H].set(q1w3.reshape(H).astype(jnp.float32))
        w3 = w3.at[1, :H].set(q2w3.reshape(H).astype(jnp.float32))
    else:
        w2f = jnp.zeros((W, W), jnp.float32)
        w2f = w2f.at[:H, :H].set(q1w2.astype(jnp.float32))
        w2f = w2f.at[H:2 * H, H:2 * H].set(q2w2.astype(jnp.float32))
        w2 = w2f[None]                                        # (1, W, W)
        w3 = jnp.zeros((2, W), jnp.float32)
        w3 = w3.at[0, :H].set(q1w3.reshape(H).astype(jnp.float32))
        w3 = w3.at[1, H:2 * H].set(q2w3.reshape(H).astype(jnp.float32))

    b3 = jnp.stack([q1b3.reshape(()), q2b3.reshape(())]).astype(jnp.float32)

    return dict(
        w1s=w1s.astype(jnp.bfloat16),
        w1a=w1a.astype(jnp.bfloat16),
        b1=b1,
        w2=w2.astype(jnp.bfloat16),
        b2=b2,
        w3=w3,
        b3=b3,
    )


@jax.jit
def critic_forward(state, action, packed):
    B, S = state.shape
    A = action.shape[1]
    W = packed["w1s"].shape[1]
    n_blk, Kb, _ = packed["w2"].shape

    state = state.astype(jnp.float32)
    action = action.astype(jnp.float32)

    # Batch tiling: full batch for small B (full-dim blocks are always legal);
    # otherwise a 128-aligned tile of ~B/2 (so v7x's two TensorCores both get work),
    # capped at _MAX_BLOCK_B to amortize the per-grid-step overhead.
    if B < 256:
        TB = B
    else:
        TB = min(_MAX_BLOCK_B, _round_up(pl.cdiv(B, 2), 128))
    grid = (pl.cdiv(B, TB),)

    def wspec(shape):
        if len(shape) == 2:
            return pl.BlockSpec(shape, lambda i: (0, 0))
        return pl.BlockSpec(shape, lambda i: (0, 0, 0))

    flops = (2 * B * (S + A) * W
             + n_blk * 2 * B * Kb * Kb
             + 4 * B * packed["w3"].shape[1])
    w_bytes = sum(int(v.size) * v.dtype.itemsize for v in packed.values())
    bytes_accessed = B * (S + A) * 4 + 2 * B * 4 + w_bytes

    q1, q2 = pl.pallas_call(
        _critic_kernel,
        out_shape=(jax.ShapeDtypeStruct((1, B), jnp.float32),
                   jax.ShapeDtypeStruct((1, B), jnp.float32)),
        grid=grid,
        in_specs=[
            pl.BlockSpec((TB, S), lambda i: (i, 0)),
            pl.BlockSpec((TB, A), lambda i: (i, 0)),
            wspec((S, W)),                       # w1s  (VMEM-resident)
            wspec((A, W)),                       # w1a
            wspec((1, W)),                       # b1
            wspec(tuple(packed["w2"].shape)),    # w2
            wspec((1, W)),                       # b2
            wspec(tuple(packed["w3"].shape)),    # w3
            pl.BlockSpec(memory_space=pltpu.MemorySpace.SMEM),  # b3 scalars
        ],
        out_specs=(pl.BlockSpec((1, TB), lambda i: (0, i)),
                   pl.BlockSpec((1, TB), lambda i: (0, i))),
        compiler_params=pltpu.CompilerParams(
            dimension_semantics=("parallel",),
            vmem_limit_bytes=32 * 1024 * 1024),
        cost_estimate=pl.CostEstimate(flops=flops, transcendentals=0,
                                      bytes_accessed=bytes_accessed),
    )(state, action,
      packed["w1s"], packed["w1a"], packed["b1"],
      packed["w2"], packed["b2"], packed["w3"], packed["b3"])

    # (1,B) -> (B,1): bit-identical row-major layout, no extra HBM pass.
    return q1.reshape(B, 1), q2.reshape(B, 1)


def _reference_forward(state, action, params):
    sa = jnp.concatenate([state, action], axis=-1).astype(jnp.float32)

    def mlp(p):
        w1, b1, w2, b2, w3, b3 = p
        h = jnp.maximum(sa @ w1 + b1, 0.0)
        h = jnp.maximum(h @ w2 + b2, 0.0)
        return h @ w3 + b3

    return mlp(params["q1"]), mlp(params["q2"])


if __name__ == "__main__":
    key = jax.random.PRNGKey(0)
    k_param, k_state, k_action = jax.random.split(key, 3)

    batch = 2
    state_dim = 8
    action_dim = 4
    hidden_dim = 32

    params = init_critic_params(k_param, state_dim, action_dim, hidden_dim)
    packed = pack_critic_params(params, state_dim)

    state = jax.random.normal(k_state, (batch, state_dim), dtype=jnp.float32)
    action = jax.random.normal(k_action, (batch, action_dim), dtype=jnp.float32)

    q1, q2 = critic_forward(state, action, packed)
    jax.block_until_ready((q1, q2))

    q1_ref, q2_ref = _reference_forward(state, action, params)
    assert q1.shape == (batch, 1) and q2.shape == (batch, 1)
    # bf16 matmul operands (f32 accumulation) -> loosened tolerance vs the f32 reference.
    assert jnp.allclose(q1, q1_ref, atol=2e-2, rtol=2e-2)
    assert jnp.allclose(q2, q2_ref, atol=2e-2, rtol=2e-2)

    # Second config: tiled batch (>=2 grid programs) and hidden_dim=128; packing
    # auto-selects block-diag fusion (v6e/v7x) or the per-head split (v5e).
    k2p, k2s, k2a = jax.random.split(jax.random.PRNGKey(1), 3)
    params2 = init_critic_params(k2p, state_dim, action_dim, 128)
    packed2 = pack_critic_params(params2, state_dim)
    state2 = jax.random.normal(k2s, (512, state_dim), dtype=jnp.float32)
    action2 = jax.random.normal(k2a, (512, action_dim), dtype=jnp.float32)
    q1b, q2b = critic_forward(state2, action2, packed2)
    jax.block_until_ready((q1b, q2b))
    q1b_ref, q2b_ref = _reference_forward(state2, action2, params2)
    assert jnp.allclose(q1b, q1b_ref, atol=3e-2, rtol=3e-2)
    assert jnp.allclose(q2b, q2b_ref, atol=3e-2, rtol=3e-2)

    print("KERNEL_OK")
</pallas_src>

<mosaic_0001>
module attributes {stable_mosaic.version = 11 : i64} {
  func.func @_critic_kernel(%arg0: i32, %arg1: memref<2x8xf32, #tpu.memory_space<vmem>>, %arg2: memref<2x4xf32, #tpu.memory_space<vmem>>, %arg3: memref<8x128xbf16, #tpu.memory_space<vmem>>, %arg4: memref<4x128xbf16, #tpu.memory_space<vmem>>, %arg5: memref<1x128xf32, #tpu.memory_space<vmem>>, %arg6: memref<1x128x128xbf16, #tpu.memory_space<vmem>>, %arg7: memref<1x128xf32, #tpu.memory_space<vmem>>, %arg8: memref<2x128xf32, #tpu.memory_space<vmem>>, %arg9: memref<2xf32, #tpu.memory_space<smem>>, %arg10: memref<1x2xf32, #tpu.memory_space<vmem>>, %arg11: memref<1x2xf32, #tpu.memory_space<vmem>>) attributes {dimension_semantics = [#tpu.dimension_semantics<parallel>], iteration_bounds = array<i64: 1>, scalar_prefetch = 0 : i64, scratch_operands = 0 : i64, tpu.core_type = #tpu.core_type<tc>, window_params = [{transform_indices = @transform_0, window_bounds = array<i64: 2, 8>}, {transform_indices = @transform_1, window_bounds = array<i64: 2, 4>}, {pipeline_mode = #tpu.pipeline_mode<synchronous>, transform_indices = @transform_2, window_bounds = array<i64: 8, 128>}, {pipeline_mode = #tpu.pipeline_mode<synchronous>, transform_indices = @transform_3, window_bounds = array<i64: 4, 128>}, {pipeline_mode = #tpu.pipeline_mode<synchronous>, transform_indices = @transform_4, window_bounds = array<i64: 1, 128>}, {pipeline_mode = #tpu.pipeline_mode<synchronous>, transform_indices = @transform_5, window_bounds = array<i64: 1, 128, 128>}, {pipeline_mode = #tpu.pipeline_mode<synchronous>, transform_indices = @transform_6, window_bounds = array<i64: 1, 128>}, {pipeline_mode = #tpu.pipeline_mode<synchronous>, transform_indices = @transform_7, window_bounds = array<i64: 2, 128>}, {transform_indices = @transform_8, window_bounds = array<i64: 2>}, {transform_indices = @transform_9, window_bounds = array<i64: 1, 2>}, {transform_indices = @transform_10, window_bounds = array<i64: 1, 2>}]} {
    %c0 = arith.constant 0 : index
    %c0_0 = arith.constant 0 : index
    %0 = vector.load %arg1[%c0, %c0_0] : memref<2x8xf32, #tpu.memory_space<vmem>>, vector<2x8xf32>
    %1 = arith.truncf %0 : vector<2x8xf32> to vector<2x8xbf16>
    %c0_1 = arith.constant 0 : index
    %c0_2 = arith.constant 0 : index
    %2 = vector.load %arg2[%c0_1, %c0_2] : memref<2x4xf32, #tpu.memory_space<vmem>>, vector<2x4xf32>
    %3 = arith.truncf %2 : vector<2x4xf32> to vector<2x4xbf16>
    %c0_3 = arith.constant 0 : index
    %c0_4 = arith.constant 0 : index
    %4 = vector.load %arg3[%c0_3, %c0_4] : memref<8x128xbf16, #tpu.memory_space<vmem>>, vector<8x128xbf16>
    %cst = arith.constant dense<0.000000e+00> : vector<2x128xf32>
    %5 = tpu.matmul %1, %4, %cst {dimension_numbers = #tpu.dot_dimension_numbers<[1], [0], [0], [1], [0, 0, 1, 1], [], []>} : vector<2x8xbf16>, vector<8x128xbf16>, vector<2x128xf32> -> vector<2x128xf32>
    %c0_5 = arith.constant 0 : index
    %c0_6 = arith.constant 0 : index
    %6 = vector.load %arg4[%c0_5, %c0_6] : memref<4x128xbf16, #tpu.memory_space<vmem>>, vector<4x128xbf16>
    %cst_7 = arith.constant dense<0.000000e+00> : vector<2x128xf32>
    %7 = tpu.matmul %3, %6, %cst_7 {dimension_numbers = #tpu.dot_dimension_numbers<[1], [0], [0], [1], [0, 0, 1, 1], [], []>} : vector<2x4xbf16>, vector<4x128xbf16>, vector<2x128xf32> -> vector<2x128xf32>
    %8 = arith.addf %5, %7 : vector<2x128xf32>
    %c0_8 = arith.constant 0 : index
    %c0_9 = arith.constant 0 : index
    %9 = vector.load %arg5[%c0_8, %c0_9] : memref<1x128xf32, #tpu.memory_space<vmem>>, vector<1x128xf32>
    %10 = vector.broadcast %9 : vector<1x128xf32> to vector<2x128xf32>
    %11 = arith.addf %8, %10 : vector<2x128xf32>
    %cst_10 = arith.constant 0.000000e+00 : f32
    %12 = vector.broadcast %cst_10 : f32 to vector<2x128xf32>
    %13 = arith.maximumf %11, %12 : vector<2x128xf32>
    %14 = arith.truncf %13 : vector<2x128xf32> to vector<2x128xbf16>
    %c0_11 = arith.constant 0 : index
    %c0_12 = arith.constant 0 : index
    %c0_13 = arith.constant 0 : index
    %15 = vector.load %arg6[%c0_11, %c0_12, %c0_13] : memref<1x128x128xbf16, #tpu.memory_space<vmem>>, vector<1x128x128xbf16>
    %16 = vector.shape_cast %15 : vector<1x128x128xbf16> to vector<128x128xbf16>
    %cst_14 = arith.constant dense<0.000000e+00> : vector<2x128xf32>
    %17 = tpu.matmul %14, %16, %cst_14 {dimension_numbers = #tpu.dot_dimension_numbers<[1], [0], [0], [1], [0, 0, 1, 1], [], []>} : vector<2x128xbf16>, vector<128x128xbf16>, vector<2x128xf32> -> vector<2x128xf32>
    %c0_15 = arith.constant 0 : index
    %c0_16 = arith.constant 0 : index
    %18 = vector.load %arg7[%c0_15, %c0_16] : memref<1x128xf32, #tpu.memory_space<vmem>>, vector<1x128xf32>
    %19 = vector.broadcast %18 : vector<1x128xf32> to vector<2x128xf32>
    %20 = arith.addf %17, %19 : vector<2x128xf32>
    %cst_17 = arith.constant 0.000000e+00 : f32
    %21 = vector.broadcast %cst_17 : f32 to vector<2x128xf32>
    %22 = arith.maximumf %20, %21 : vector<2x128xf32>
    %c0_18 = arith.constant 0 : index
    %c0_19 = arith.constant 0 : index
    %23 = vector.load %arg8[%c0_18, %c0_19] : memref<2x128xf32, #tpu.memory_space<vmem>>, vector<1x128xf32>
    %24 = vector.broadcast %23 : vector<1x128xf32> to vector<2x128xf32>
    %25 = arith.mulf %22, %24 : vector<2x128xf32>
    %cst_20 = arith.constant dense<0.000000e+00> : vector<2xf32>
    %26 = vector.multi_reduction <add>, %25, %cst_20 [1] : vector<2x128xf32> to vector<2xf32>
    %c0_21 = arith.constant 0 : index
    %27 = memref.load %arg9[%c0_21] : memref<2xf32, #tpu.memory_space<smem>>
    %28 = vector.broadcast %27 : f32 to vector<2xf32>
    %29 = arith.addf %26, %28 : vector<2xf32>
    %c1 = arith.constant 1 : index
    %c0_22 = arith.constant 0 : index
    %30 = vector.load %arg8[%c1, %c0_22] : memref<2x128xf32, #tpu.memory_space<vmem>>, vector<1x128xf32>
    %31 = vector.broadcast %30 : vector<1x128xf32> to vector<2x128xf32>
    %32 = arith.mulf %22, %31 : vector<2x128xf32>
    %cst_23 = arith.constant dense<0.000000e+00> : vector<2xf32>
    %33 = vector.multi_reduction <add>, %32, %cst_23 [1] : vector<2x128xf32> to vector<2xf32>
    %c1_24 = arith.constant 1 : index
    %34 = memref.load %arg9[%c1_24] : memref<2xf32, #tpu.memory_space<smem>>
    %35 = vector.broadcast %34 : f32 to vector<2xf32>
    %36 = arith.addf %33, %35 : vector<2xf32>
    %37 = vector.shape_cast %29 : vector<2xf32> to vector<1x2xf32>
    %c0_25 = arith.constant 0 : index
    %c0_26 = arith.constant 0 : index
    %38 = vector.load %arg10[%c0_25, %c0_26] : memref<1x2xf32, #tpu.memory_space<vmem>>, vector<1x2xf32>
    tpu.vector_store %arg10[%c0_25, %c0_26], %37 {strides = array<i32>} : memref<1x2xf32, #tpu.memory_space<vmem>>, vector<1x2xf32>,
    %39 = vector.shape_cast %36 : vector<2xf32> to vector<1x2xf32>
    %c0_27 = arith.constant 0 : index
    %c0_28 = arith.constant 0 : index
    %40 = vector.load %arg11[%c0_27, %c0_28] : memref<1x2xf32, #tpu.memory_space<vmem>>, vector<1x2xf32>
    tpu.vector_store %arg11[%c0_27, %c0_28], %39 {strides = array<i32>} : memref<1x2xf32, #tpu.memory_space<vmem>>, vector<1x2xf32>,
    return
  }
  func.func @transform_0(%arg0: i32) -> (i32, i32) {
    %c0_i32 = arith.constant 0 : i32
    %c0_i32_0 = arith.constant 0 : i32
    return %arg0, %c0_i32 : i32, i32
  }
  func.func @transform_1(%arg0: i32) -> (i32, i32) {
    %c0_i32 = arith.constant 0 : i32
    %c0_i32_0 = arith.constant 0 : i32
    return %arg0, %c0_i32 : i32, i32
  }
  func.func @transform_2(%arg0: i32) -> (i32, i32) {
    %c0_i32 = arith.constant 0 : i32
    %c0_i32_0 = arith.constant 0 : i32
    %c0_i32_1 = arith.constant 0 : i32
    return %c0_i32, %c0_i32_0 : i32, i32
  }
  func.func @transform_3(%arg0: i32) -> (i32, i32) {
    %c0_i32 = arith.constant 0 : i32
    %c0_i32_0 = arith.constant 0 : i32
    %c0_i32_1 = arith.constant 0 : i32
    return %c0_i32, %c0_i32_0 : i32, i32
  }
  func.func @transform_4(%arg0: i32) -> (i32, i32) {
    %c0_i32 = arith.constant 0 : i32
    %c0_i32_0 = arith.constant 0 : i32
    %c0_i32_1 = arith.constant 0 : i32
    return %c0_i32, %c0_i32_0 : i32, i32
  }
  func.func @transform_5(%arg0: i32) -> (i32, i32, i32) {
    %c0_i32 = arith.constant 0 : i32
    %c0_i32_0 = arith.constant 0 : i32
    %c0_i32_1 = arith.constant 0 : i32
    %c0_i32_2 = arith.constant 0 : i32
    return %c0_i32, %c0_i32_0, %c0_i32_1 : i32, i32, i32
  }
  func.func @transform_6(%arg0: i32) -> (i32, i32) {
    %c0_i32 = arith.constant 0 : i32
    %c0_i32_0 = arith.constant 0 : i32
    %c0_i32_1 = arith.constant 0 : i32
    return %c0_i32, %c0_i32_0 : i32, i32
  }
  func.func @transform_7(%arg0: i32) -> (i32, i32) {
    %c0_i32 = arith.constant 0 : i32
    %c0_i32_0 = arith.constant 0 : i32
    %c0_i32_1 = arith.constant 0 : i32
    return %c0_i32, %c0_i32_0 : i32, i32
  }
  func.func @transform_8(%arg0: i32) -> i32 {
    %c0_i32 = arith.constant 0 : i32
    %c0_i32_0 = arith.constant 0 : i32
    return %c0_i32 : i32
  }
  func.func @transform_9(%arg0: i32) -> (i32, i32) {
    %c0_i32 = arith.constant 0 : i32
    %c0_i32_0 = arith.constant 0 : i32
    return %c0_i32, %arg0 : i32, i32
  }
  func.func @transform_10(%arg0: i32) -> (i32, i32) {
    %c0_i32 = arith.constant 0 : i32
    %c0_i32_0 = arith.constant 0 : i32
    return %c0_i32, %arg0 : i32, i32
  }
}

</mosaic_0001>

<llo_original>
// kernel: critic_forward.1
$region0: #{critic_forward.1}
  #allocation0 [shape = 'u32[]', space=smem, size = 0x4, offset = 0x4, fixed_abs, tag = 'smem constant byte address 0x4 - core index']
  #allocation1 [shape = 'u32[144,128]{1,0:T(1,128)}', space=vmem, size = 0x12000, scoped, tag = 'internal scratch']
  %s0 = inlined_call_operand.hbm [shape: f32[2,8], index: 0, kind: input, shape index: {}]
  %s1 = inlined_call_operand.hbm [shape: f32[2,4], index: 1, kind: input, shape index: {}]
  %s2 = inlined_call_operand.vmem [shape: bf16[8,128], index: 2, kind: input, shape index: {}]
  %s3 = inlined_call_operand.vmem [shape: bf16[4,128], index: 3, kind: input, shape index: {}]
  %s4 = inlined_call_operand.vmem [shape: f32[1,128], index: 4, kind: input, shape index: {}]
  %s5 = inlined_call_operand.hbm [shape: bf16[1,128,128], index: 5, kind: input, shape index: {}]
  %s6 = inlined_call_operand.hbm [shape: f32[1,128], index: 6, kind: input, shape index: {}]
  %s7 = inlined_call_operand.vmem [shape: f32[2,128], index: 7, kind: input, shape index: {}]
  %s8 = inlined_call_operand.hbm [shape: f32[2], index: 8, kind: input, shape index: {}]
  %s9 = inlined_call_operand.hbm [shape: f32[1,2], index: 9, kind: output, shape index: {0}]
  %s10 = inlined_call_operand.hbm [shape: f32[1,2], index: 10, kind: output, shape index: {1}]
  %11 = xla_tuple %s9, %s10
  %s12 = sld [smem:[#allocation0]]
  $region74: #{critic_forward.1} parent=0
    _
  %s14 = ssub.s32 1, %s12
  %s15 = scalar_select 0, %s14, %s12
  $region1: #{critic_forward.1} parent=0
    #allocation2 [shape = 'u8[1024]{0}', space=vmem, size = 0x400, scoped, tag = 'input window, operand 0, single buffered']
    #allocation3 [shape = 's32[1]{0}', space=sflag, size = 0x4, scoped, tag = 'scoped memory for critic_forward.1']
    #allocation4 [shape = 's32[1]{0}', space=sflag, size = 0x4, scoped, tag = 'scoped memory for critic_forward.1']
    #allocation5 [shape = 's32[1]{0}', space=sflag, size = 0x4, scoped, tag = 'scoped memory for critic_forward.1']
    #allocation6 [shape = 'u8[1024]{0}', space=vmem, size = 0x400, scoped, tag = 'input window, operand 1, single buffered']
    #allocation7 [shape = 's32[1]{0}', space=sflag, size = 0x4, scoped, tag = 'scoped memory for critic_forward.1']
    #allocation8 [shape = 'u8[32768]{0}', space=vmem, size = 0x8000, scoped, tag = 'input window, operand 5, single buffered']
    #allocation9 [shape = 'u8[512]{0}', space=vmem, size = 0x400, scoped, tag = 'input window, operand 6, single buffered']
    #allocation10 [shape = 's32[1]{0}', space=sflag, size = 0x4, scoped, tag = 'scoped memory for critic_forward.1']
    #allocation11 [shape = 'u8[512]{0}', space=smem, size = 0x200, scoped, tag = 'input window, operand 8, single buffered']
    #allocation12 [shape = 'u8[512]{0}', space=vmem, size = 0x400, scoped, tag = 'output window, operand 0, single buffered']
    #allocation13 [shape = 'u8[512]{0}', space=vmem, size = 0x400, scoped, tag = 'output window, operand 1, single buffered']
    #allocation14 [shape = 's32[1]{0}', space=sflag, size = 0x4, scoped, tag = 'scoped memory for critic_forward.1']
    %16 = vsyncpa [#allocation3], 0
    %17 = vsyncpa [#allocation7], 0
    %18 = vsyncpa [#allocation10], 0
    %19 = vsyncpa [#allocation5], 0
    %20 = vsyncpa [#allocation4], 0
    %21 = vsyncpa [#allocation14], 0
    // Predicated region
    $region2: #{critic_forward.1} parent=1 // pred_check
      _
    $region3: #{critic_forward.1} parent=1 // pred_check_branch
      %23 = sbr.rel (0) target = $region5
    $region4: #{critic_forward.1} parent=1 // pred_region
      %s25 = ssub.s32 32, 32
      %26 = vsyncadd [#allocation3], %s25
      %s28 = sshll.u32 [#allocation2], 4
      %s29 = int_to_ptr.vmem [resolvable:$true] %s28
      %31 = dma.hbm_to_vmem [thread:$0]  %s0, 32, %s29, [#allocation3]
    $region5: #{critic_forward.1} parent=1 // pred_fallthru
      _
    // Predicated region
    $region6: #{critic_forward.1} parent=1 // pred_check
      _
    $region7: #{critic_forward.1} parent=1 // pred_check_branch
      %33 = sbr.rel (0) target = $region9
    $region8: #{critic_forward.1} parent=1 // pred_region
      %s35 = ssub.s32 32, 32
      %36 = vsyncadd [#allocation7], %s35
      %s38 = sshll.u32 [#allocation6], 4
      %s39 = int_to_ptr.vmem [resolvable:$true] %s38
      %41 = dma.hbm_to_vmem [thread:$0]  %s1, 32, %s39, [#allocation7]
    $region9: #{critic_forward.1} parent=1 // pred_fallthru
      _
    // Predicated region
    $region10: #{critic_forward.1} parent=1 // pred_check
      _
    $region11: #{critic_forward.1} parent=1 // pred_check_branch
      %43 = sbr.rel (0) target = $region13
    $region12: #{critic_forward.1} parent=1 // pred_region
      _
    $region13: #{critic_forward.1} parent=1 // pred_fallthru
      _
    // Predicated region
    $region14: #{critic_forward.1} parent=1 // pred_check
      _
    $region15: #{critic_forward.1} parent=1 // pred_check_branch
      %45 = sbr.rel (0) target = $region17
    $region16: #{critic_forward.1} parent=1 // pred_region
      _
    $region17: #{critic_forward.1} parent=1 // pred_fallthru
      _
    // Predicated region
    $region18: #{critic_forward.1} parent=1 // pred_check
      _
    $region19: #{critic_forward.1} parent=1 // pred_check_branch
      %47 = sbr.rel (0) target = $region21
    $region20: #{critic_forward.1} parent=1 // pred_region
      _
    $region21: #{critic_forward.1} parent=1 // pred_fallthru
      _
    // Predicated region
    $region22: #{critic_forward.1} parent=1 // pred_check
      _
    $region23: #{critic_forward.1} parent=1 // pred_check_branch
      %49 = sbr.rel (0) target = $region25
    $region24: #{critic_forward.1} parent=1 // pred_region
      %s51 = ssub.s32 1024, 1024
      %52 = vsyncadd [#allocation7], %s51
      %s53 = sshll.u32 [#allocation8], 4
      %s54 = int_to_ptr.vmem [resolvable:$true] %s53
      %59 = dma.hbm_to_vmem [thread:$0]  %s5, 1024, %s54, [#allocation7], 64, 64, 4
    $region25: #{critic_forward.1} parent=1 // pred_fallthru
      _
    // Predicated region
    $region26: #{critic_forward.1} parent=1 // pred_check
      _
    $region27: #{critic_forward.1} parent=1 // pred_check_branch
      %61 = sbr.rel (0) target = $region29
    $region28: #{critic_forward.1} parent=1 // pred_region
      %s63 = ssub.s32 16, 16
      %64 = vsyncadd [#allocation10], %s63
      %s66 = sshll.u32 [#allocation9], 4
      %s67 = int_to_ptr.vmem [resolvable:$true] %s66
      %69 = dma.hbm_to_vmem [thread:$0]  %s6, 16, %s67, [#allocation10]
    $region29: #{critic_forward.1} parent=1 // pred_fallthru
      _
    // Predicated region
    $region30: #{critic_forward.1} parent=1 // pred_check
      _
    $region31: #{critic_forward.1} parent=1 // pred_check_branch
      %71 = sbr.rel (0) target = $region33
    $region32: #{critic_forward.1} parent=1 // pred_region
      _
    $region33: #{critic_forward.1} parent=1 // pred_fallthru
      _
    // Predicated region
    $region34: #{critic_forward.1} parent=1 // pred_check
      _
    $region35: #{critic_forward.1} parent=1 // pred_check_branch
      %73 = sbr.rel (0) target = $region37
    $region36: #{critic_forward.1} parent=1 // pred_region
      %s75 = ssub.s32 16, 16
      %76 = vsyncadd [#allocation5], %s75
      %79 = dma.hbm_to_smem %s8, 16, [#allocation11], [#allocation5]
    $region37: #{critic_forward.1} parent=1 // pred_fallthru
      _
    // Predicated region
    $region38: #{critic_forward.1} parent=1 // pred_check
      _
    $region39: #{critic_forward.1} parent=1 // pred_check_branch
      %81 = sbr.rel (0) target = $region41
    $region40: #{critic_forward.1} parent=1 // pred_region
      %82 = dma.done [#allocation3], 32
    $region41: #{critic_forward.1} parent=1 // pred_fallthru
      _
    // Predicated region
    $region42: #{critic_forward.1} parent=1 // pred_check
      _
    $region43: #{critic_forward.1} parent=1 // pred_check_branch
      %84 = sbr.rel (0) target = $region45
    $region44: #{critic_forward.1} parent=1 // pred_region
      %85 = dma.done [#allocation7], 32
    $region45: #{critic_forward.1} parent=1 // pred_fallthru
      _
    // Predicated region
    $region46: #{critic_forward.1} parent=1 // pred_check
      _
    $region47: #{critic_forward.1} parent=1 // pred_check_branch
      %87 = sbr.rel (0) target = $region49
    $region48: #{critic_forward.1} parent=1 // pred_region
      %88 = dma.done [#allocation7], 1024
    $region49: #{critic_forward.1} parent=1 // pred_fallthru
      _
    // Predicated region
    $region50: #{critic_forward.1} parent=1 // pred_check
      _
    $region51: #{critic_forward.1} parent=1 // pred_check_branch
      %90 = sbr.rel (0) target = $region53
    $region52: #{critic_forward.1} parent=1 // pred_region
      %91 = dma.done [#allocation10], 16
    $region53: #{critic_forward.1} parent=1 // pred_fallthru
      _
    // Predicated region
    $region54: #{critic_forward.1} parent=1 // pred_check
      _
    $region55: #{critic_forward.1} parent=1 // pred_check_branch
      %93 = sbr.rel (0) target = $region57
    $region56: #{critic_forward.1} parent=1 // pred_region
      %94 = dma.done [#allocation5], 16
    $region57: #{critic_forward.1} parent=1 // pred_fallthru
      _
    %95 = sfence
    %v97 = vld [vmem:[#allocation2] sm:$0x3]
    %v98 = vpack.c.bf16 %v97, %v97
    %v99 = vld [vmem:[#allocation6] sm:$0x3]
    %v100 = vpack.c.bf16 %v99, %v99
    %v101 = vld [vmem:[%s2] sm:$0xf]
    %v102 = vld [vmem:[%s3] sm:$0x3]
    %vm103 = vcmask 31744
    %v105 = vsel %vm103, %v100, 0
    %vm107 = vcmask 1041408
    %v109 = vsel %vm107, %v102, 0
    %111 = vmatprep.subr.bf16.mxu0 0
    %112 = vmatpush1.bf16.msra.mxu0 0
    %113 = vmatprep.subr.bf16.mxu0 0
    %114 = vmatpush1.bf16.msra.mxu0 0
    %115 = vmatprep.subr.bf16.mxu0 0
    %116 = vmatpush1.bf16.msra.mxu0 0
    %117 = vmatprep.subr.bf16.mxu0 0
    %118 = vmatpush1.bf16.msra.mxu0 0
    %119 = vmatprep.subr.bf16.mxu0 0
    %120 = vmatpush1.bf16.msra.mxu0 0
    %121 = vmatprep.subr.bf16.mxu0 0
    %122 = vmatpush1.bf16.msra.mxu0 0
    %123 = vmatprep.subr.bf16.mxu0 0
    %124 = vmatpush1.bf16.msra.mxu0 0
    %125 = vmatprep.subr.bf16.mxu0 0
    %126 = vmatpush1.bf16.msra.mxu0 %v109
    %127 = vmatprep.subr.bf16.mxu0 0
    %128 = vmatpush2.bf16.msra.mxu0 0
    %129 = vmatprep.subr.bf16.mxu0 0
    %130 = vmatpush2.bf16.msra.mxu0 0
    %131 = vmatprep.subr.bf16.mxu0 0
    %132 = vmatpush2.bf16.msra.mxu0 0
    %133 = vmatprep.subr.bf16.mxu0 0
    %134 = vmatpush2.bf16.msra.mxu0 0
    %135 = vmatprep.subr.bf16.mxu0 0
    %136 = vmatpush2.bf16.msra.mxu0 0
    %137 = vmatprep.subr.bf16.mxu0 0
    %138 = vmatpush2.bf16.msra.mxu0 0
    %139 = vmatprep.subr.bf16.mxu0 0
    %140 = vmatpush2.bf16.msra.mxu0 0
    %141 = vmatprep.subr.bf16.mxu0 0
    %142 = vmatpush2.bf16.msra.mxu0 0
    %143 = vmatprep.mubr.bf16.mxu0 0
    %144 = vmatmul.mubr.bf16.gmra.mxu0 %v105
    %v145 = vpop.f32.mrf.mxu0
    %v146 = vadd.f32 0.0, %v145
    %v147 = vpop.f32.mrf.mxu0
    %v148 = vpop.f32.mrf.mxu0
    %v149 = vpop.f32.mrf.mxu0
    %150 = vdwg.mxu0
    %vm151 = vcmask 64512
    %v153 = vsel %vm151, %v98, 0
    %vm155 = vcmask 1043456
    %v157 = vsel %vm155, %v101, 0
    %159 = vmatprep.subr.bf16.mxu0 0
    %160 = vmatpush1.bf16.msra.mxu0 0
    %161 = vmatprep.subr.bf16.mxu0 0
    %162 = vmatpush1.bf16.msra.mxu0 0
    %163 = vmatprep.subr.bf16.mxu0 0
    %164 = vmatpush1.bf16.msra.mxu0 0
    %165 = vmatprep.subr.bf16.mxu0 0
    %166 = vmatpush1.bf16.msra.mxu0 0
    %167 = vmatprep.subr.bf16.mxu0 0
    %168 = vmatpush1.bf16.msra.mxu0 0
    %169 = vmatprep.subr.bf16.mxu0 0
    %170 = vmatpush1.bf16.msra.mxu0 0
    %171 = vmatprep.subr.bf16.mxu0 0
    %172 = vmatpush1.bf16.msra.mxu0 0
    %173 = vmatprep.subr.bf16.mxu0 0
    %174 = vmatpush1.bf16.msra.mxu0 %v157
    %175 = vmatprep.subr.bf16.mxu0 0
    %176 = vmatpush2.bf16.msra.mxu0 0
    %177 = vmatprep.subr.bf16.mxu0 0
    %178 = vmatpush2.bf16.msra.mxu0 0
    %179 = vmatprep.subr.bf16.mxu0 0
    %180 = vmatpush2.bf16.msra.mxu0 0
    %181 = vmatprep.subr.bf16.mxu0 0
    %182 = vmatpush2.bf16.msra.mxu0 0
    %183 = vmatprep.subr.bf16.mxu0 0
    %184 = vmatpush2.bf16.msra.mxu0 0
    %185 = vmatprep.subr.bf16.mxu0 0
    %186 = vmatpush2.bf16.msra.mxu0 0
    %187 = vmatprep.subr.bf16.mxu0 0
    %188 = vmatpush2.bf16.msra.mxu0 0
    %189 = vmatprep.subr.bf16.mxu0 0
    %190 = vmatpush2.bf16.msra.mxu0 0
    %191 = vmatprep.mubr.bf16.mxu0 0
    %192 = vmatmul.mubr.bf16.gmra.mxu0 %v153
    %v193 = vpop.f32.mrf.mxu0
    %v194 = vadd.f32 %v146, %v193
    %v195 = vpop.f32.mrf.mxu0
    %v196 = vpop.f32.mrf.mxu0
    %v197 = vpop.f32.mrf.mxu0
    %198 = vdwg.mxu0
    %v199 = vld [vmem:[%s4] sm:$0x1]
    %v201 = vlaneseq
    %v202 = vshrl.u32 %v201, 7
    %v203 = vsub.s32 0, %v202
    %v204 = vrot.slane %v199, %v203
    %v206 = vadd.f32 %v194, %v204
    %v207 = vmax.f32 %v206, 0.0
    %v208 = vpack.c.bf16 %v207, %v207
    %v209 = vld [vmem:[#allocation8] sm:$0xf]
    %v210 = vld [vmem:[#allocation8 + $0x4] sm:$0xf]
    %v211 = vld [vmem:[#allocation8 + $0x8] sm:$0xf]
    %v212 = vld [vmem:[#allocation8 + $0xc] sm:$0xf]
    %v213 = vld [vmem:[#allocation8 + $0x10] sm:$0xf]
    %v214 = vld [vmem:[#allocation8 + $0x14] sm:$0xf]
    %v215 = vld [vmem:[#allocation8 + $0x18] sm:$0xf]
    %v216 = vld [vmem:[#allocation8 + $0x1c] sm:$0xf]
    %v217 = vld [vmem:[#allocation8 + $0x20] sm:$0xf]
    %v218 = vld [vmem:[#allocation8 + $0x24] sm:$0xf]
    %v219 = vld [vmem:[#allocation8 + $0x28] sm:$0xf]
    %v220 = vld [vmem:[#allocation8 + $0x2c] sm:$0xf]
    %v221 = vld [vmem:[#allocation8 + $0x30] sm:$0xf]
    %v222 = vld [vmem:[#allocation8 + $0x34] sm:$0xf]
    %v223 = vld [vmem:[#allocation8 + $0x38] sm:$0xf]
    %v224 = vld [vmem:[#allocation8 + $0x3c] sm:$0xf]
    %v225 = vld [vmem:[#allocation9] sm:$0x1]
    %v227 = vlaneseq
    %v228 = vshrl.u32 %v227, 7
    %v229 = vsub.s32 0, %v228
    %v230 = vrot.slane %v225, %v229
    %v248 = vunpack.c.l.b16 %v209
    %v249 = vunpack.c.l.b16 %v210
    %v250 = vunpack.c.l.b16 %v211
    %v251 = vunpack.c.l.b16 %v212
    %v252 = vunpack.c.l.b16 %v213
    %v253 = vunpack.c.l.b16 %v214
    %v254 = vunpack.c.l.b16 %v215
    %v255 = vunpack.c.l.b16 %v216
    %v256 = vunpack.c.l.b16 %v217
    %v257 = vunpack.c.l.b16 %v218
    %v258 = vunpack.c.l.b16 %v219
    %v259 = vunpack.c.l.b16 %v220
    %v260 = vunpack.c.l.b16 %v221
    %v261 = vunpack.c.l.b16 %v222
    %v262 = vunpack.c.l.b16 %v223
    %v263 = vunpack.c.l.b16 %v224
    %v264 = vpack.c.b16 %v249, %v248
    %v265 = vpack.c.b16 %v251, %v250
    %v266 = vpack.c.b16 %v253, %v252
    %v267 = vpack.c.b16 %v255, %v254
    %v268 = vpack.c.b16 %v257, %v256
    %v269 = vpack.c.b16 %v259, %v258
    %v270 = vpack.c.b16 %v261, %v260
    %v271 = vpack.c.b16 %v263, %v262
    %280 = vmatprep.subr.bf16.mxu0 0
    %281 = vmatpush1.bf16.msra.mxu0 %v271
    %282 = vmatprep.subr.bf16.mxu0 0
    %283 = vmatpush1.bf16.msra.mxu0 %v270
    %284 = vmatprep.subr.bf16.mxu0 0
    %285 = vmatpush1.bf16.msra.mxu0 %v269
    %286 = vmatprep.subr.bf16.mxu0 0
    %287 = vmatpush1.bf16.msra.mxu0 %v268
    %288 = vmatprep.subr.bf16.mxu0 0
    %289 = vmatpush1.bf16.msra.mxu0 %v267
    %290 = vmatprep.subr.bf16.mxu0 0
    %291 = vmatpush1.bf16.msra.mxu0 %v266
    %292 = vmatprep.subr.bf16.mxu0 0
    %293 = vmatpush1.bf16.msra.mxu0 %v265
    %294 = vmatprep.subr.bf16.mxu0 0
    %295 = vmatpush1.bf16.msra.mxu0 %v264
    %296 = vmatprep.subr.bf16.mxu0 0
    %297 = vmatpush2.bf16.msra.mxu0 0
    %298 = vmatprep.subr.bf16.mxu0 0
    %299 = vmatpush2.bf16.msra.mxu0 0
    %300 = vmatprep.subr.bf16.mxu0 0
    %301 = vmatpush2.bf16.msra.mxu0 0
    %302 = vmatprep.subr.bf16.mxu0 0
    %303 = vmatpush2.bf16.msra.mxu0 0
    %304 = vmatprep.subr.bf16.mxu0 0
    %305 = vmatpush2.bf16.msra.mxu0 0
    %306 = vmatprep.subr.bf16.mxu0 0
    %307 = vmatpush2.bf16.msra.mxu0 0
    %308 = vmatprep.subr.bf16.mxu0 0
    %309 = vmatpush2.bf16.msra.mxu0 0
    %310 = vmatprep.subr.bf16.mxu0 0
    %311 = vmatpush2.bf16.msra.mxu0 0
    %312 = vmatprep.mubr.bf16.mxu0 0
    %313 = vmatmul.mubr.bf16.gmra.mxu0 %v208
    %v314 = vpop.f32.mrf.mxu0
    %v315 = vadd.f32 %v230, %v314
    %v316 = vpop.f32.mrf.mxu0
    %v317 = vpop.f32.mrf.mxu0
    %v318 = vpop.f32.mrf.mxu0
    %319 = vdwg.mxu0
    %v320 = vmax.f32 %v315, 0.0
    %v321 = vld [vmem:[%s7] sm:$0x1]
    %v322 = vlaneseq
    %v323 = vshrl.u32 %v322, 7
    %v324 = vsub.s32 0, %v323
    %v325 = vrot.slane %v321, %v324
    %v326 = vmul.f32 %v320, %v325
    %v327 = vsel %vm107, %v326, 0.0
    %328 = vadd.xlane.f32.xlu0 %v327
    %v329 = vpop.xlane.xlu0 %328
    %s330 = sld [smem:[#allocation11]]
    %v331 = vstv %s330
    %v332 = vadd.f32 %v329, %v331
    %v333 = vld [vmem:[%s7 + $0x1] sm:$0x1]
    %v334 = vlaneseq
    %v335 = vshrl.u32 %v334, 7
    %v336 = vsub.s32 0, %v335
    %v337 = vrot.slane %v333, %v336
    %v338 = vmul.f32 %v320, %v337
    %v339 = vsel %vm107, %v338, 0.0
    %340 = vadd.xlane.f32.xlu0 %v339
    %v341 = vpop.xlane.xlu0 %340
    %s342 = sld [smem:[#allocation11 + $0x1]]
    %v343 = vstv %s342
    %v344 = vadd.f32 %v341, %v343
    %v346 = vlaneseq
    %v347 = vand.u32 %v346, 127
    %v348 = vlaneseq
    %v349 = vshrl.u32 %v348, 7
    %v350 = vsub.s32 %v347, %v349
    %v351 = vrot.slane %v332, %v350
    %vm353 = vcmask 8192
    %354 = vst.msk [vmem:[#allocation12] sm:$0x1] %vm353, %v351
    %v356 = vlaneseq
    %v357 = vshrl.u32 %v356, 7
    %v358 = vsub.s32 %v347, %v357
    %v359 = vrot.slane %v344, %v358
    %361 = vst.msk [vmem:[#allocation13] sm:$0x1] %vm353, %v359
    // Predicated region
    $region58: #{critic_forward.1} parent=1 // pred_check
      _
    $region59: #{critic_forward.1} parent=1 // pred_check_branch
      %363 = sbr.rel (0) target = $region61
    $region60: #{critic_forward.1} parent=1 // pred_region
      %s365 = ssub.s32 16, 16
      %366 = vsyncadd [#allocation4], %s365
      %s368 = sshll.u32 [#allocation12], 4
      %s369 = int_to_ptr.vmem [resolvable:$true] %s368
      %371 = dma.vmem_to_hbm [thread:$0]  %s369, 16, %s9, [#allocation4]
    $region61: #{critic_forward.1} parent=1 // pred_fallthru
      _
    // Predicated region
    $region62: #{critic_forward.1} parent=1 // pred_check
      _
    $region63: #{critic_forward.1} parent=1 // pred_check_branch
      %373 = sbr.rel (0) target = $region65
    $region64: #{critic_forward.1} parent=1 // pred_region
      %s375 = ssub.s32 16, 16
      %376 = vsyncadd [#allocation14], %s375
      %s378 = sshll.u32 [#allocation13], 4
      %s379 = int_to_ptr.vmem [resolvable:$true] %s378
      %381 = dma.vmem_to_hbm [thread:$0]  %s379, 16, %s10, [#allocation14]
    $region65: #{critic_forward.1} parent=1 // pred_fallthru
      _
    // Predicated region
    $region66: #{critic_forward.1} parent=1 // pred_check
      _
    $region67: #{critic_forward.1} parent=1 // pred_check_branch
      %383 = sbr.rel (0) target = $region69
    $region68: #{critic_forward.1} parent=1 // pred_region
      %384 = dma.done [#allocation4], 16
    $region69: #{critic_forward.1} parent=1 // pred_fallthru
      _
    // Predicated region
    $region70: #{critic_forward.1} parent=1 // pred_check
      _
    $region71: #{critic_forward.1} parent=1 // pred_check_branch
      %386 = sbr.rel (0) target = $region73
    $region72: #{critic_forward.1} parent=1 // pred_region
      %387 = dma.done [#allocation14], 16
    $region73: #{critic_forward.1} parent=1 // pred_fallthru
      _
    %388 = vsyncpa [#allocation3], 1
    %389 = vsyncpa [#allocation7], 1
    %390 = vsyncpa [#allocation10], 1
    %391 = vsyncpa [#allocation4], 1
    %392 = vsyncpa [#allocation14], 1
    %393 = vsyncpa [#allocation5], 1

</llo_original>
